<compile_context>
chip_gen: v7x
topology: tpu7x:2x2x1
jax: 0.10.0
libtpu: 0.0.40
codegen_flags: <defaults>
</compile_context>

<pallas_src>
import functools

import jax
import jax.numpy as jnp
from jax.experimental import pallas as pl
from jax.experimental.pallas import tpu as pltpu


def _round_up(x, m):
    return ((x + m - 1) // m) * m


def _pick_tile_nx(nx, max_tile_nx):
    """Lane tile: multiple of 128 and <= nx (blocks never exceed array dims),
    as large as allowed, then rebalanced so the edge tile isn't mostly empty."""
    if nx <= 128:
        return nx                                     # single block == full array dim
    max_tile = max(128, (max_tile_nx // 128) * 128)
    tile = min(max_tile, (nx // 128) * 128)
    n = -(-nx // tile)                                # tile count at this tile size
    tile = min(tile, _round_up(-(-nx // n), 128))     # balance tiles, keep count n
    return tile


def _has_bf16_eup():
    """True on chips whose VPU/EUP are bf16-capable (v6e 'Trillium', v7x)."""
    try:
        kind = jax.devices()[0].device_kind.lower()
    except Exception:
        return False
    return any(tag in kind for tag in ("v6", "v7", "trillium"))


# ---------------------------------------------------------------------------
# Pallas kernel
# ---------------------------------------------------------------------------
def _deeponet_kernel(nb_extra, nt_extra, cdtype, tanh_dtype, cache_trunk,
                     u_ref, g_ref, bias0_ref, *refs):
    """Fused branch-MLP + trunk-MLP + channel-product reduction.

    refs = (Wb0_sigT,
            Wb1T, bb1, ..., Wb{nb}T, bb{nb},          # nb_extra pairs
            wt0_col, bt0_col,
            Wt1T, bt1, ..., Wt{nt}T, bt{nt},          # nt_extra pairs
            b0_smem, out_ref, t_cache_scratch)

    Activations are (channels, NX_tile): channels on sublanes, NX on lanes.
    """
    t_cache = refs[-1]
    out_ref = refs[-2]
    b0_ref = refs[-3]
    w = refs[:-3]

    wb0 = w[0]                                   # (H1, TW)
    branch_rest = w[1:1 + 2 * nb_extra]
    wt0 = w[1 + 2 * nb_extra]                    # (Ht, 1)
    bt0 = w[2 + 2 * nb_extra]                    # (Ht, 1)
    trunk_rest = w[3 + 2 * nb_extra:]

    # ---- branch net ----
    # u streamed at its HBM dtype; cast for the MXU in-kernel (VPU, hidden under MXU/EUP).
    u = u_ref[0].astype(cdtype)                  # (TW, tile_nx)
    # layer 0: signal channels through the MXU, folded scalar features via bias0.
    h = jnp.dot(wb0[...], u, preferred_element_type=jnp.float32) + bias0_ref[0]
    for i in range(nb_extra):
        a = jnp.tanh(h.astype(tanh_dtype))       # EUP; bf16 on v6e/v7x halves pushes + ld/st bytes
        h = jnp.dot(branch_rest[2 * i][...], a.astype(cdtype),
                    preferred_element_type=jnp.float32) + branch_rest[2 * i + 1][...]

    # ---- trunk net ----
    def compute_trunk():
        g = g_ref[0]                             # (1, tile_nx), f32
        # layer 0 has K=1: degenerate matmul -> VPU broadcast multiply.
        t = wt0[...] * g + bt0[...]              # (Ht, 1)*(1, nx) -> (Ht, nx), f32
        for i in range(nt_extra):
            a = jnp.tanh(t.astype(tanh_dtype))
            t = jnp.dot(trunk_rest[2 * i][...], a.astype(cdtype),
                        preferred_element_type=jnp.float32) + trunk_rest[2 * i + 1][...]
        return t                                 # (TF, tile_nx), f32

    if cache_trunk:
        # grid = (nx_tiles, B): batch is the inner 'arbitrary' axis; the grid is
        # batch-invariant, so compute the trunk once per NX tile and reuse it.
        @pl.when(pl.program_id(1) == 0)
        def _():
            t_cache[...] = compute_trunk()
        t = t_cache[...]
    else:
        t = compute_trunk()

    # einsum('mbi,mbi->mb'): sublane reduction over the TF channel axis.
    out = jnp.sum(h * t, axis=0, keepdims=True) + b0_ref[0, 0]   # (1, tile_nx)
    out_ref[0] = out.astype(out_ref.dtype)


# ---------------------------------------------------------------------------
# Host-side wrapper (glue: scalar-feature fold, tiling, pallas_call plumbing)
# ---------------------------------------------------------------------------
def deeponet_forward(u, grid, dt, variables, params, eq_variables,
                     *, max_tile_nx=8192, compute_dtype=jnp.bfloat16,
                     tanh_in_compute_dtype=None, cache_trunk=None):
    """u: (B, TW, NX)   grid: (B, NX)   dt: (1,)   -> (B, 1, NX) float32."""
    B, TW, NX = u.shape
    branch_params, trunk_params, b0 = params
    cdtype = compute_dtype

    # bf16 tanh only where the EUP/VPU is bf16-capable (v6e/v7x); keep f32 on v5e.
    if tanh_in_compute_dtype is None:
        tanh_in_compute_dtype = (jnp.dtype(cdtype) != jnp.float32) and _has_bf16_eup()
    tanh_dtype = cdtype if tanh_in_compute_dtype else jnp.float32

    # Trunk caching is only valid if `grid` is identical across the batch.
    if cache_trunk is None:
        try:
            cache_trunk = bool(jnp.all(grid == grid[:1]))
        except Exception:   # tracers (under jit): stay general
            cache_trunk = False
    cache_trunk = bool(cache_trunk) and B > 1

    # ---- fold scalar features (dx, dt, alpha/beta/gamma) into a per-batch bias ----
    W0, bb0 = branch_params[0]                        # (TW+2+n_eq, H1), (1, H1)
    W0 = jnp.asarray(W0, jnp.float32)
    H1 = W0.shape[1]
    gridf = jnp.asarray(grid, jnp.float32)
    dx = gridf[:, 1] - gridf[:, 0]                    # (B,)
    scal = [dx, jnp.broadcast_to(jnp.asarray(dt, jnp.float32), (B,))]
    for name in ("alpha", "beta", "gamma"):
        if name in eq_variables:
            scal.append(jnp.asarray(variables[name], jnp.float32) / eq_variables[name])
    scal = jnp.stack(scal, axis=-1)                   # (B, 2+n_eq)
    bias0 = jnp.asarray(bb0, jnp.float32).reshape(1, H1) + scal @ W0[TW:, :]
    bias0 = bias0[:, :, None]                         # (B, H1, 1) f32

    # ---- pre-transpose weights to (out, in); biases to (out, 1) columns ----
    weight_args = [W0[:TW, :].T.astype(cdtype)]       # (H1, TW)
    for (wi, bi) in branch_params[1:]:
        weight_args.append(jnp.asarray(wi, jnp.float32).T.astype(cdtype))
        weight_args.append(jnp.asarray(bi, jnp.float32).reshape(-1, 1))
    wt0, bt0 = trunk_params[0]
    weight_args.append(jnp.asarray(wt0, jnp.float32).T)   # (Ht, 1) (VPU path, f32)
    weight_args.append(jnp.asarray(bt0, jnp.float32).reshape(-1, 1))
    for (wi, bi) in trunk_params[1:]:
        weight_args.append(jnp.asarray(wi, jnp.float32).T.astype(cdtype))
        weight_args.append(jnp.asarray(bi, jnp.float32).reshape(-1, 1))
    b0_smem = jnp.asarray(b0, jnp.float32).reshape(1, 1)
    TF = trunk_params[-1][0].shape[1]

    # ---- lane-dense tiling over NX: no padding / staging of u, cdiv grid ----
    tile_nx = _pick_tile_nx(NX, max_tile_nx)
    n_tiles = pl.cdiv(NX, tile_nx)
    g3 = (gridf[:1] if cache_trunk else gridf)[:, None, :]     # (1 or B, 1, NX)

    nb_extra = len(branch_params) - 1
    nt_extra = len(trunk_params) - 1

    if cache_trunk:
        grid_dims = (n_tiles, B)                       # batch innermost, 'arbitrary'
        dim_sem = ("parallel", "arbitrary")
        u_map = lambda j, b: (b, 0, j)
        g_map = lambda j, b: (0, 0, j)
        bias_map = lambda j, b: (b, 0, 0)
        out_map = lambda j, b: (b, 0, j)
    else:
        grid_dims = (B, n_tiles)
        dim_sem = ("parallel", "parallel")
        u_map = lambda b, j: (b, 0, j)
        g_map = lambda b, j: (b, 0, j)
        bias_map = lambda b, j: (b, 0, 0)
        out_map = lambda b, j: (b, 0, j)

    in_specs = [
        pl.BlockSpec((1, TW, tile_nx), u_map),         # u: (TW, nx) signal tile, native dtype
        pl.BlockSpec((1, 1, tile_nx), g_map),          # grid row
        pl.BlockSpec((1, H1, 1), bias_map),            # per-batch folded bias
    ]
    for arr in weight_args:                            # small, grid-invariant weights
        in_specs.append(pl.BlockSpec(arr.shape, lambda i, j: (0, 0)))
    in_specs.append(pl.BlockSpec(memory_space=pltpu.MemorySpace.SMEM))   # scalar bias b

    out_specs = pl.BlockSpec((1, 1, tile_nx), out_map)
    out_shape = jax.ShapeDtypeStruct((B, 1, NX), jnp.float32)   # un-padded, edge block masked

    # VMEM budget: double-buffered u/grid/out tiles + a few (wmax, tile_nx) f32 temps.
    u_itemsize = jnp.dtype(u.dtype).itemsize
    wmax = max([H1] + [wi.shape[1] for wi, _ in branch_params[1:]]
               + [wi.shape[1] for wi, _ in trunk_params])
    est = tile_nx * (2 * TW * u_itemsize + 4 * 4 + 6 * wmax * 4) + (2 << 20)
    vmem_limit_bytes = int(min(48 << 20, max(32 << 20, 2 * est)))

    kernel = functools.partial(_deeponet_kernel, nb_extra, nt_extra, cdtype,
                               tanh_dtype, cache_trunk)
    out = pl.pallas_call(
        kernel,
        out_shape=out_shape,
        grid_spec=pltpu.PrefetchScalarGridSpec(
            num_scalar_prefetch=0,
            grid=grid_dims,
            in_specs=in_specs,
            out_specs=out_specs,
            scratch_shapes=[pltpu.VMEM((TF, tile_nx), jnp.float32)],   # trunk cache
        ),
        compiler_params=pltpu.CompilerParams(
            dimension_semantics=dim_sem,
            vmem_limit_bytes=vmem_limit_bytes,
        ),
    )(u, g3, bias0, *weight_args, b0_smem)

    return out                                          # (B, 1, NX) float32


# ---------------------------------------------------------------------------
# Deterministic parameter init (mimics nn.Linear uniform(-1/sqrt(fan_in), ...))
# ---------------------------------------------------------------------------
def init_linear(key, fan_in, fan_out):
    kw, kb = jax.random.split(key)
    bound = 1.0 / float(fan_in) ** 0.5
    w = jax.random.uniform(kw, (fan_in, fan_out), jnp.float32, -bound, bound)
    b = jax.random.uniform(kb, (1, fan_out), jnp.float32, -bound, bound)
    return w, b


def init_params(key, layer_sizes_branch, layer_sizes_trunk):
    branch, trunk = [], []
    for i in range(len(layer_sizes_branch) - 1):
        key, sub = jax.random.split(key)
        branch.append(init_linear(sub, layer_sizes_branch[i], layer_sizes_branch[i + 1]))
    for i in range(len(layer_sizes_trunk) - 1):
        key, sub = jax.random.split(key)
        trunk.append(init_linear(sub, layer_sizes_trunk[i], layer_sizes_trunk[i + 1]))
    b0 = jnp.float32(0.0)   # self.b = Parameter(0.0)
    return branch, trunk, b0


# ---------------------------------------------------------------------------
# Pure-JAX reference (mirrors the PyTorch forward exactly; f32)
# ---------------------------------------------------------------------------
def reference_forward(u, grid, dt, variables, params, eq_variables):
    B, TW, NX = u.shape
    branch_params, trunk_params, b0 = params
    x = jnp.transpose(u, (0, 2, 1))
    dx = (grid[:, 1] - grid[:, 0])[:, None, None]
    feats = [x, jnp.broadcast_to(dx, (B, NX, 1)),
             jnp.broadcast_to(dt[:, None, None], (B, NX, 1))]
    for name in ("alpha", "beta", "gamma"):
        if name in eq_variables:
            v = variables[name][:, None, None] / eq_variables[name]
            feats.append(jnp.broadcast_to(v, (B, NX, 1)))
    h = jnp.concatenate(feats, axis=-1)
    for i, (w, b) in enumerate(branch_params):
        h = h @ w + b
        if i < len(branch_params) - 1:
            h = jnp.tanh(h)
    t = grid[..., None]
    for i, (w, b) in enumerate(trunk_params):
        t = t @ w + b
        if i < len(trunk_params) - 1:
            t = jnp.tanh(t)
    out = jnp.einsum("mbi,mbi->mb", h, t) + b0
    return out[:, None, :]


# ---------------------------------------------------------------------------
def _make_inputs(key, B, NX, time_window):
    k_u, k_a, k_b = jax.random.split(key, 3)
    u = jax.random.normal(k_u, (B, time_window, NX), jnp.float32)
    grid = jnp.broadcast_to(jnp.linspace(0.0, 1.0, NX, dtype=jnp.float32)[None, :], (B, NX))
    dt = jnp.array([0.05], jnp.float32)
    variables = {
        "alpha": jax.random.uniform(k_a, (B,), jnp.float32, 0.1, 1.0),
        "beta": jax.random.uniform(k_b, (B,), jnp.float32, 0.1, 1.0),
    }
    return u, grid, dt, variables


if __name__ == "__main__":
    # Config consistent with the module's __init__ (hidden=32, TW=8, TF=4).
    time_window, time_future = 8, 4
    eq_variables = {"alpha": 1.0, "beta": 0.5}

    layer_sizes_branch = [32, 32]
    layer_sizes_trunk = [32]
    layer_sizes_branch = [len(eq_variables) + 2 + time_window] + layer_sizes_branch + [time_future]
    layer_sizes_trunk = [1] + layer_sizes_trunk + [time_future]

    key = jax.random.PRNGKey(0)
    k_in, k_in2, k_p = jax.random.split(key, 3)
    params = init_params(k_p, layer_sizes_branch, layer_sizes_trunk)

    # --- small shape (B=2, NX=16), f32 compute: exact check vs reference ---
    u, grid, dt, variables = _make_inputs(k_in, 2, 16, time_window)
    out_f32 = deeponet_forward(u, grid, dt, variables, params, eq_variables,
                               compute_dtype=jnp.float32)
    out_f32 = jax.block_until_ready(out_f32)
    ref = reference_forward(u, grid, dt, variables, params, eq_variables)
    assert out_f32.shape == (2, 1, 16), out_f32.shape
    assert jnp.allclose(out_f32, ref, atol=1e-4, rtol=1e-4), \
        float(jnp.max(jnp.abs(out_f32 - ref)))

    # --- same shape, bf16 matmul inputs (+bf16 tanh on v6e/v7x): loose check ---
    out_bf16 = deeponet_forward(u, grid, dt, variables, params, eq_variables,
                                compute_dtype=jnp.bfloat16)
    out_bf16 = jax.block_until_ready(out_bf16)
    assert out_bf16.shape == (2, 1, 16), out_bf16.shape
    assert jnp.allclose(out_bf16, ref, atol=1e-1, rtol=1e-1), \
        float(jnp.max(jnp.abs(out_bf16 - ref)))

    # --- non-batch-invariant grid: exercises the non-cached trunk path, f32 exact ---
    grid_nb = grid + 0.01 * jnp.arange(2, dtype=jnp.float32)[:, None]
    out_nb = deeponet_forward(u, grid_nb, dt, variables, params, eq_variables,
                              compute_dtype=jnp.float32)
    out_nb = jax.block_until_ready(out_nb)
    ref_nb = reference_forward(u, grid_nb, dt, variables, params, eq_variables)
    assert jnp.allclose(out_nb, ref_nb, atol=1e-4, rtol=1e-4), \
        float(jnp.max(jnp.abs(out_nb - ref_nb)))

    # --- larger NX exercising multi-tile cdiv grid + masked edge tile, f32 exact ---
    u2, grid2, dt2, variables2 = _make_inputs(k_in2, 2, 4000, time_window)
    out2 = deeponet_forward(u2, grid2, dt2, variables2, params, eq_variables,
                            compute_dtype=jnp.float32)
    out2 = jax.block_until_ready(out2)
    ref2 = reference_forward(u2, grid2, dt2, variables2, params, eq_variables)
    assert out2.shape == (2, 1, 4000), out2.shape
    assert jnp.allclose(out2, ref2, atol=1e-4, rtol=1e-4), \
        float(jnp.max(jnp.abs(out2 - ref2)))

    print("KERNEL_OK")
</pallas_src>

<mosaic_0001>
module attributes {stable_mosaic.version = 11 : i64} {
  func.func @_deeponet_kernel(%arg0: i32, %arg1: i32, %arg2: memref<1x8x16xf32, #tpu.memory_space<vmem>>, %arg3: memref<1x1x16xf32, #tpu.memory_space<vmem>>, %arg4: memref<1x32x1xf32, #tpu.memory_space<vmem>>, %arg5: memref<32x8xf32, #tpu.memory_space<vmem>>, %arg6: memref<32x32xf32, #tpu.memory_space<vmem>>, %arg7: memref<32x1xf32, #tpu.memory_space<vmem>>, %arg8: memref<4x32xf32, #tpu.memory_space<vmem>>, %arg9: memref<4x1xf32, #tpu.memory_space<vmem>>, %arg10: memref<32x1xf32, #tpu.memory_space<vmem>>, %arg11: memref<32x1xf32, #tpu.memory_space<vmem>>, %arg12: memref<4x32xf32, #tpu.memory_space<vmem>>, %arg13: memref<4x1xf32, #tpu.memory_space<vmem>>, %arg14: memref<1x1xf32, #tpu.memory_space<smem>>, %arg15: memref<1x1x16xf32, #tpu.memory_space<vmem>>, %arg16: memref<4x16xf32, #tpu.memory_space<vmem>>) attributes {dimension_semantics = [#tpu.dimension_semantics<parallel>, #tpu.dimension_semantics<arbitrary>], iteration_bounds = array<i64: 1, 2>, scalar_prefetch = 0 : i64, scratch_operands = 1 : i64, tpu.core_type = #tpu.core_type<tc>, window_params = [{transform_indices = @transform_0, window_bounds = array<i64: 1, 8, 16>}, {transform_indices = @transform_1, window_bounds = array<i64: 1, 1, 16>}, {transform_indices = @transform_2, window_bounds = array<i64: 1, 32, 1>}, {pipeline_mode = #tpu.pipeline_mode<synchronous>, transform_indices = @transform_3, window_bounds = array<i64: 32, 8>}, {pipeline_mode = #tpu.pipeline_mode<synchronous>, transform_indices = @transform_4, window_bounds = array<i64: 32, 32>}, {pipeline_mode = #tpu.pipeline_mode<synchronous>, transform_indices = @transform_5, window_bounds = array<i64: 32, 1>}, {pipeline_mode = #tpu.pipeline_mode<synchronous>, transform_indices = @transform_6, window_bounds = array<i64: 4, 32>}, {pipeline_mode = #tpu.pipeline_mode<synchronous>, transform_indices = @transform_7, window_bounds = array<i64: 4, 1>}, {pipeline_mode = #tpu.pipeline_mode<synchronous>, transform_indices = @transform_8, window_bounds = array<i64: 32, 1>}, {pipeline_mode = #tpu.pipeline_mode<synchronous>, transform_indices = @transform_9, window_bounds = array<i64: 32, 1>}, {pipeline_mode = #tpu.pipeline_mode<synchronous>, transform_indices = @transform_10, window_bounds = array<i64: 4, 32>}, {pipeline_mode = #tpu.pipeline_mode<synchronous>, transform_indices = @transform_11, window_bounds = array<i64: 4, 1>}, {transform_indices = @transform_12, window_bounds = array<i64: 1, 1>}, {transform_indices = @transform_13, window_bounds = array<i64: 1, 1, 16>}]} {
    %c0 = arith.constant 0 : index
    %c0_0 = arith.constant 0 : index
    %c0_1 = arith.constant 0 : index
    %0 = vector.load %arg2[%c0, %c0_0, %c0_1] : memref<1x8x16xf32, #tpu.memory_space<vmem>>, vector<1x8x16xf32>
    %1 = vector.shape_cast %0 : vector<1x8x16xf32> to vector<8x16xf32>
    %c0_2 = arith.constant 0 : index
    %c0_3 = arith.constant 0 : index
    %2 = vector.load %arg5[%c0_2, %c0_3] : memref<32x8xf32, #tpu.memory_space<vmem>>, vector<32x8xf32>
    %cst = arith.constant dense<0.000000e+00> : vector<32x16xf32>
    %3 = tpu.matmul %2, %1, %cst {dimension_numbers = #tpu.dot_dimension_numbers<[1], [0], [0], [1], [0, 0, 1, 1], [], []>} : vector<32x8xf32>, vector<8x16xf32>, vector<32x16xf32> -> vector<32x16xf32>
    %c0_4 = arith.constant 0 : index
    %c0_5 = arith.constant 0 : index
    %c0_6 = arith.constant 0 : index
    %4 = vector.load %arg4[%c0_4, %c0_5, %c0_6] : memref<1x32x1xf32, #tpu.memory_space<vmem>>, vector<1x32x1xf32>
    %5 = vector.shape_cast %4 : vector<1x32x1xf32> to vector<32x1xf32>
    %6 = vector.broadcast %5 : vector<32x1xf32> to vector<32x16xf32>
    %7 = arith.addf %3, %6 : vector<32x16xf32>
    %8 = math.tanh %7 : vector<32x16xf32>
    %c0_7 = arith.constant 0 : index
    %c0_8 = arith.constant 0 : index
    %9 = vector.load %arg6[%c0_7, %c0_8] : memref<32x32xf32, #tpu.memory_space<vmem>>, vector<32x32xf32>
    %cst_9 = arith.constant dense<0.000000e+00> : vector<32x16xf32>
    %10 = tpu.matmul %9, %8, %cst_9 {dimension_numbers = #tpu.dot_dimension_numbers<[1], [0], [0], [1], [0, 0, 1, 1], [], []>} : vector<32x32xf32>, vector<32x16xf32>, vector<32x16xf32> -> vector<32x16xf32>
    %c0_10 = arith.constant 0 : index
    %c0_11 = arith.constant 0 : index
    %11 = vector.load %arg7[%c0_10, %c0_11] : memref<32x1xf32, #tpu.memory_space<vmem>>, vector<32x1xf32>
    %12 = vector.broadcast %11 : vector<32x1xf32> to vector<32x16xf32>
    %13 = arith.addf %10, %12 : vector<32x16xf32>
    %14 = math.tanh %13 : vector<32x16xf32>
    %c0_12 = arith.constant 0 : index
    %c0_13 = arith.constant 0 : index
    %15 = vector.load %arg8[%c0_12, %c0_13] : memref<4x32xf32, #tpu.memory_space<vmem>>, vector<4x32xf32>
    %cst_14 = arith.constant dense<0.000000e+00> : vector<4x16xf32>
    %16 = tpu.matmul %15, %14, %cst_14 {dimension_numbers = #tpu.dot_dimension_numbers<[1], [0], [0], [1], [0, 0, 1, 1], [], []>} : vector<4x32xf32>, vector<32x16xf32>, vector<4x16xf32> -> vector<4x16xf32>
    %c0_15 = arith.constant 0 : index
    %c0_16 = arith.constant 0 : index
    %17 = vector.load %arg9[%c0_15, %c0_16] : memref<4x1xf32, #tpu.memory_space<vmem>>, vector<4x1xf32>
    %18 = vector.broadcast %17 : vector<4x1xf32> to vector<4x16xf32>
    %19 = arith.addf %16, %18 : vector<4x16xf32>
    %c0_i32 = arith.constant 0 : i32
    %20 = arith.cmpi eq, %arg1, %c0_i32 : i32
    %21 = arith.extui %20 : i1 to i32
    %c0_i32_17 = arith.constant 0 : i32
    %22 = arith.cmpi ne, %21, %c0_i32_17 : i32
    scf.if %22 {
      %c0_26 = arith.constant 0 : index
      %c0_27 = arith.constant 0 : index
      %c0_28 = arith.constant 0 : index
      %33 = vector.load %arg3[%c0_26, %c0_27, %c0_28] : memref<1x1x16xf32, #tpu.memory_space<vmem>>, vector<1x1x16xf32>
      %34 = vector.shape_cast %33 : vector<1x1x16xf32> to vector<1x16xf32>
      %c0_29 = arith.constant 0 : index
      %c0_30 = arith.constant 0 : index
      %35 = vector.load %arg10[%c0_29, %c0_30] : memref<32x1xf32, #tpu.memory_space<vmem>>, vector<32x1xf32>
      %36 = vector.broadcast %35 : vector<32x1xf32> to vector<32x16xf32>
      %37 = vector.broadcast %34 : vector<1x16xf32> to vector<32x16xf32>
      %38 = arith.mulf %36, %37 : vector<32x16xf32>
      %c0_31 = arith.constant 0 : index
      %c0_32 = arith.constant 0 : index
      %39 = vector.load %arg11[%c0_31, %c0_32] : memref<32x1xf32, #tpu.memory_space<vmem>>, vector<32x1xf32>
      %40 = vector.broadcast %39 : vector<32x1xf32> to vector<32x16xf32>
      %41 = arith.addf %38, %40 : vector<32x16xf32>
      %42 = math.tanh %41 : vector<32x16xf32>
      %c0_33 = arith.constant 0 : index
      %c0_34 = arith.constant 0 : index
      %43 = vector.load %arg12[%c0_33, %c0_34] : memref<4x32xf32, #tpu.memory_space<vmem>>, vector<4x32xf32>
      %cst_35 = arith.constant dense<0.000000e+00> : vector<4x16xf32>
      %44 = tpu.matmul %43, %42, %cst_35 {dimension_numbers = #tpu.dot_dimension_numbers<[1], [0], [0], [1], [0, 0, 1, 1], [], []>} : vector<4x32xf32>, vector<32x16xf32>, vector<4x16xf32> -> vector<4x16xf32>
      %c0_36 = arith.constant 0 : index
      %c0_37 = arith.constant 0 : index
      %45 = vector.load %arg13[%c0_36, %c0_37] : memref<4x1xf32, #tpu.memory_space<vmem>>, vector<4x1xf32>
      %46 = vector.broadcast %45 : vector<4x1xf32> to vector<4x16xf32>
      %47 = arith.addf %44, %46 : vector<4x16xf32>
      %c0_38 = arith.constant 0 : index
      %c0_39 = arith.constant 0 : index
      %48 = vector.load %arg16[%c0_38, %c0_39] : memref<4x16xf32, #tpu.memory_space<vmem>>, vector<4x16xf32>
      tpu.vector_store %arg16[%c0_38, %c0_39], %47 {strides = array<i32>} : memref<4x16xf32, #tpu.memory_space<vmem>>, vector<4x16xf32>,
    } else {
    }
    %c0_18 = arith.constant 0 : index
    %c0_19 = arith.constant 0 : index
    %23 = vector.load %arg16[%c0_18, %c0_19] : memref<4x16xf32, #tpu.memory_space<vmem>>, vector<4x16xf32>
    %24 = arith.mulf %19, %23 : vector<4x16xf32>
    %cst_20 = arith.constant dense<0.000000e+00> : vector<16xf32>
    %25 = vector.multi_reduction <add>, %24, %cst_20 [0] : vector<4x16xf32> to vector<16xf32>
    %26 = vector.shape_cast %25 : vector<16xf32> to vector<1x16xf32>
    %c0_21 = arith.constant 0 : index
    %c0_22 = arith.constant 0 : index
    %27 = memref.load %arg14[%c0_21, %c0_22] : memref<1x1xf32, #tpu.memory_space<smem>>
    %28 = vector.broadcast %27 : f32 to vector<1x16xf32>
    %29 = arith.addf %26, %28 : vector<1x16xf32>
    %c0_23 = arith.constant 0 : index
    %c0_24 = arith.constant 0 : index
    %c0_25 = arith.constant 0 : index
    %30 = vector.load %arg15[%c0_23, %c0_24, %c0_25] : memref<1x1x16xf32, #tpu.memory_space<vmem>>, vector<1x1x16xf32>
    %31 = vector.shape_cast %30 : vector<1x1x16xf32> to vector<1x16xf32>
    %32 = vector.shape_cast %29 : vector<1x16xf32> to vector<1x1x16xf32>
    tpu.vector_store %arg15[%c0_23, %c0_24, %c0_25], %32 {strides = array<i32>} : memref<1x1x16xf32, #tpu.memory_space<vmem>>, vector<1x1x16xf32>,
    return
  }
  func.func @transform_0(%arg0: i32, %arg1: i32) -> (i32, i32, i32) {
    %c0_i32 = arith.constant 0 : i32
    %c0_i32_0 = arith.constant 0 : i32
    return %arg1, %c0_i32, %arg0 : i32, i32, i32
  }
  func.func @transform_1(%arg0: i32, %arg1: i32) -> (i32, i32, i32) {
    %c0_i32 = arith.constant 0 : i32
    %c0_i32_0 = arith.constant 0 : i32
    %c0_i32_1 = arith.constant 0 : i32
    return %c0_i32, %c0_i32_0, %arg0 : i32, i32, i32
  }
  func.func @transform_2(%arg0: i32, %arg1: i32) -> (i32, i32, i32) {
    %c0_i32 = arith.constant 0 : i32
    %c0_i32_0 = arith.constant 0 : i32
    %c0_i32_1 = arith.constant 0 : i32
    return %arg1, %c0_i32, %c0_i32_0 : i32, i32, i32
  }
  func.func @transform_3(%arg0: i32, %arg1: i32) -> (i32, i32) {
    %c0_i32 = arith.constant 0 : i32
    %c0_i32_0 = arith.constant 0 : i32
    %c0_i32_1 = arith.constant 0 : i32
    return %c0_i32, %c0_i32_0 : i32, i32
  }
  func.func @transform_4(%arg0: i32, %arg1: i32) -> (i32, i32) {
    %c0_i32 = arith.constant 0 : i32
    %c0_i32_0 = arith.constant 0 : i32
    %c0_i32_1 = arith.constant 0 : i32
    return %c0_i32, %c0_i32_0 : i32, i32
  }
  func.func @transform_5(%arg0: i32, %arg1: i32) -> (i32, i32) {
    %c0_i32 = arith.constant 0 : i32
    %c0_i32_0 = arith.constant 0 : i32
    %c0_i32_1 = arith.constant 0 : i32
    return %c0_i32, %c0_i32_0 : i32, i32
  }
  func.func @transform_6(%arg0: i32, %arg1: i32) -> (i32, i32) {
    %c0_i32 = arith.constant 0 : i32
    %c0_i32_0 = arith.constant 0 : i32
    %c0_i32_1 = arith.constant 0 : i32
    return %c0_i32, %c0_i32_0 : i32, i32
  }
  func.func @transform_7(%arg0: i32, %arg1: i32) -> (i32, i32) {
    %c0_i32 = arith.constant 0 : i32
    %c0_i32_0 = arith.constant 0 : i32
    %c0_i32_1 = arith.constant 0 : i32
    return %c0_i32, %c0_i32_0 : i32, i32
  }
  func.func @transform_8(%arg0: i32, %arg1: i32) -> (i32, i32) {
    %c0_i32 = arith.constant 0 : i32
    %c0_i32_0 = arith.constant 0 : i32
    %c0_i32_1 = arith.constant 0 : i32
    return %c0_i32, %c0_i32_0 : i32, i32
  }
  func.func @transform_9(%arg0: i32, %arg1: i32) -> (i32, i32) {
    %c0_i32 = arith.constant 0 : i32
    %c0_i32_0 = arith.constant 0 : i32
    %c0_i32_1 = arith.constant 0 : i32
    return %c0_i32, %c0_i32_0 : i32, i32
  }
  func.func @transform_10(%arg0: i32, %arg1: i32) -> (i32, i32) {
    %c0_i32 = arith.constant 0 : i32
    %c0_i32_0 = arith.constant 0 : i32
    %c0_i32_1 = arith.constant 0 : i32
    return %c0_i32, %c0_i32_0 : i32, i32
  }
  func.func @transform_11(%arg0: i32, %arg1: i32) -> (i32, i32) {
    %c0_i32 = arith.constant 0 : i32
    %c0_i32_0 = arith.constant 0 : i32
    %c0_i32_1 = arith.constant 0 : i32
    return %c0_i32, %c0_i32_0 : i32, i32
  }
  func.func @transform_12(%arg0: i32, %arg1: i32) -> (i32, i32) {
    %c0_i32 = arith.constant 0 : i32
    %c0_i32_0 = arith.constant 0 : i32
    %c0_i32_1 = arith.constant 0 : i32
    return %c0_i32, %c0_i32_0 : i32, i32
  }
  func.func @transform_13(%arg0: i32, %arg1: i32) -> (i32, i32, i32) {
    %c0_i32 = arith.constant 0 : i32
    %c0_i32_0 = arith.constant 0 : i32
    return %arg1, %c0_i32, %arg0 : i32, i32, i32
  }
}

</mosaic_0001>

<llo_original>
// kernel: tpu_custom_call.1
$region0: #{tpu_custom_call.1}
  #allocation0 [shape = 'u32[]', space=smem, size = 0x4, offset = 0x4, fixed_abs, tag = 'smem constant byte address 0x4 - core index']
  #allocation1 [shape = 'u32[144,128]{1,0:T(1,128)}', space=vmem, size = 0x12000, scoped, tag = 'internal scratch']
  #allocation2 [shape = 'f32[4,16]{1,0:T(4,128)}', space=vmem, size = 0x800, scoped, tag = 'scratch operand']
  #allocation3 [shape = 'f32[1,1]{1,0:T(1,128)S(6)}', space=smem, size = 0x200, scoped, tag = 'scoped memory for tpu_custom_call.1']
  %s0 = inlined_call_operand.vmem [shape: f32[2,8,16], index: 0, kind: input, shape index: {}]
  %s1 = inlined_call_operand.vmem [shape: f32[1,1,16], index: 1, kind: input, shape index: {}]
  %s2 = inlined_call_operand.vmem [shape: f32[2,32,1], index: 2, kind: input, shape index: {}]
  %s3 = inlined_call_operand.vmem [shape: f32[32,8], index: 3, kind: input, shape index: {}]
  %s4 = inlined_call_operand.vmem [shape: f32[32,32], index: 4, kind: input, shape index: {}]
  %s5 = inlined_call_operand.vmem [shape: f32[32,1], index: 5, kind: input, shape index: {}]
  %s6 = inlined_call_operand.vmem [shape: f32[4,32], index: 6, kind: input, shape index: {}]
  %s7 = inlined_call_operand.vmem [shape: f32[4,1], index: 7, kind: input, shape index: {}]
  %s8 = inlined_call_operand.vmem [shape: f32[32,1], index: 8, kind: input, shape index: {}]
  %s9 = inlined_call_operand.vmem [shape: f32[32,1], index: 9, kind: input, shape index: {}]
  %s10 = inlined_call_operand.vmem [shape: f32[4,32], index: 10, kind: input, shape index: {}]
  %s11 = inlined_call_operand.vmem [shape: f32[4,1], index: 11, kind: input, shape index: {}]
  %s12 = inlined_call_operand.<no memory space> [shape: f32[1,1], index: 12, kind: input, shape index: {}]
  %s13 = inlined_call_operand.hbm [shape: f32[2,1,16], index: 13, kind: output, shape index: {}]
  %s14 = sld [smem:[#allocation0]]
  $region89: #{tpu_custom_call.1} parent=0
    _
  %s16 = ssub.s32 1, %s14
  %s17 = scalar_select 0, %s16, %s14
  %18 = sst [smem:[#allocation3]] %s12
  $region1: #{tpu_custom_call.1} parent=0
    #allocation4 [shape = 'u8[1024]{0}', space=vmem, size = 0x400, scoped, tag = 'output window, operand 0']
    #allocation5 [shape = 's32[2]{0}', space=sflag, size = 0x8, scoped, tag = 'scoped memory for tpu_custom_call.1']
    %19 = vsyncpa [#allocation5], 0
    %s20 = scalar_lea.sflag [#allocation5], 1
    %21 = vsyncpa %s20, 0
    loop: start=0, step=1, limit=4
    $region2: #{tpu_custom_call.1} parent=1 // loop_pre_header
      _
    $region3: #{tpu_custom_call.1} parent=1 // loop_header
      %s23 = sphi 0, %s27
      %p24 = scmp.ge.s32.totalorder %s23, 4
      %s30 = sphi 0, %s42
      %s31 = sphi 0, %s38
      %s32 = sphi 0, %s30
      %s33 = sphi 0, %s31
      %s34 = sphi 0, %s32
      %s35 = sphi 0, %s33
      %s47 = sphi 0, %s49
      %s50 = sphi 0, %s47
      %s51 = sphi 0, %s50
      %s67 = sphi 0, %s51
      %s73 = sphi 0, %s75
      %s76 = sphi 0, %s73
      %s77 = sphi 0, %s76
      %s93 = sphi 0, %s77
      %s99 = sphi 0, %s101
      %s102 = sphi 0, %s99
      %s103 = sphi 0, %s102
      %s119 = sphi 0, %s103
      %s123 = sphi 0, %s123
      %s125 = sphi 0, %s123
      %s126 = sphi 0, %s125
      %s140 = sphi 0, %s126
      %s144 = sphi 0, %s144
      %s146 = sphi 0, %s144
      %s147 = sphi 0, %s146
      %s161 = sphi 0, %s147
      %s165 = sphi 0, %s165
      %s167 = sphi 0, %s165
      %s168 = sphi 0, %s167
      %s182 = sphi 0, %s168
      %s186 = sphi 0, %s186
      %s188 = sphi 0, %s186
      %s189 = sphi 0, %s188
      %s203 = sphi 0, %s189
      %s207 = sphi 0, %s207
      %s209 = sphi 0, %s207
      %s210 = sphi 0, %s209
      %s224 = sphi 0, %s210
      %s228 = sphi 0, %s228
      %s230 = sphi 0, %s228
      %s231 = sphi 0, %s230
      %s245 = sphi 0, %s231
      %s249 = sphi 0, %s249
      %s251 = sphi 0, %s249
      %s252 = sphi 0, %s251
      %s266 = sphi 0, %s252
      %s270 = sphi 0, %s270
      %s272 = sphi 0, %s270
      %s273 = sphi 0, %s272
      %s287 = sphi 0, %s273
      %s291 = sphi 0, %s291
      %s293 = sphi 0, %s291
      %s294 = sphi 0, %s293
      %s308 = sphi 0, %s294
      %s312 = sphi 0, %s312
      %s314 = sphi 0, %s312
      %s315 = sphi 0, %s314
      %s329 = sphi 0, %s315
      %s337 = sphi 0, %s339
      %s340 = sphi 0, %s337
      %s341 = sphi 0, %s340
      %s357 = sphi 0, %s341
    $region4: #{tpu_custom_call.1} parent=1 // loop_header_branch
      %26 = sbr.rel (%p24) target = $region8
    $region5: #{tpu_custom_call.1} parent=1 // loop_body
      %s28 = ssub.s32 %s23, 1
      %s29 = ssub.s32 %s23, 2
      %s36 = sadd.s32 1, %s31
      %p37 = scmp.ge.s32.totalorder %s36, 2
      %s38 = scalar_select %p37, 0, %s36
      %s39 = sadd.s32 1, %s30
      %s40 = scalar_select %p37, %s39, %s30
      %p41 = scmp.ge.s32.totalorder %s40, 1
      %s42 = scalar_select %p41, 0, %s40
      %s43 = ssub.s32 %s31, %s38
      %s44 = ssub.s32 %s30, %s42
      %s45 = sor.u32 %s43, %s44
      %p46 = scmp.eq.s32.totalorder %s45, 0
      %s48 = sadd.s32 %s47, 1
      %s49 = scalar_select %p46, %s47, %s48
      %p52 = pneg %p46
      %p53 = scmp.eq.s32.totalorder %s23, 1
      %p54 = por %p52, %p53
      %p55 = scmp.ne.s32.totalorder %s47, %s50
      %p56 = scmp.eq.s32.totalorder %s23, 0
      %p57 = por %p55, %p56
      %p58 = scmp.ne.s32.totalorder %s47, %s50
      %p59 = scmp.eq.s32.totalorder %s28, 1
      %p60 = por %p58, %p59
      %p61 = scmp.ne.s32.totalorder %s50, %s51
      %p62 = scmp.eq.s32.totalorder %s28, 0
      %p63 = por %p61, %p62
      %p64 = scmp.ne.s32.totalorder %s50, %s51
      %p65 = scmp.eq.s32.totalorder %s29, 1
      %p66 = por %p64, %p65
      %p68 = scmp.ne.s32.totalorder %s51, %s67
      %p69 = scmp.eq.s32.totalorder %s29, 0
      %p70 = por %p68, %p69
      %s71 = ssub.s32 %s30, %s42
      %p72 = scmp.eq.s32.totalorder %s71, 0
      %s74 = sadd.s32 %s73, 1
      %s75 = scalar_select %p72, %s73, %s74
      %p78 = pneg %p72
      %p79 = scmp.eq.s32.totalorder %s23, 1
      %p80 = por %p78, %p79
      %p81 = scmp.ne.s32.totalorder %s73, %s76
      %p82 = scmp.eq.s32.totalorder %s23, 0
      %p83 = por %p81, %p82
      %p84 = scmp.ne.s32.totalorder %s73, %s76
      %p85 = scmp.eq.s32.totalorder %s28, 1
      %p86 = por %p84, %p85
      %p87 = scmp.ne.s32.totalorder %s76, %s77
      %p88 = scmp.eq.s32.totalorder %s28, 0
      %p89 = por %p87, %p88
      %p90 = scmp.ne.s32.totalorder %s76, %s77
      %p91 = scmp.eq.s32.totalorder %s29, 1
      %p92 = por %p90, %p91
      %p94 = scmp.ne.s32.totalorder %s77, %s93
      %p95 = scmp.eq.s32.totalorder %s29, 0
      %p96 = por %p94, %p95
      %s97 = ssub.s32 %s31, %s38
      %p98 = scmp.eq.s32.totalorder %s97, 0
      %s100 = sadd.s32 %s99, 1
      %s101 = scalar_select %p98, %s99, %s100
      %p104 = pneg %p98
      %p105 = scmp.eq.s32.totalorder %s23, 1
      %p106 = por %p104, %p105
      %p107 = scmp.ne.s32.totalorder %s99, %s102
      %p108 = scmp.eq.s32.totalorder %s23, 0
      %p109 = por %p107, %p108
      %p110 = scmp.ne.s32.totalorder %s99, %s102
      %p111 = scmp.eq.s32.totalorder %s28, 1
      %p112 = por %p110, %p111
      %p113 = scmp.ne.s32.totalorder %s102, %s103
      %p114 = scmp.eq.s32.totalorder %s28, 0
      %p115 = por %p113, %p114
      %p116 = scmp.ne.s32.totalorder %s102, %s103
      %p117 = scmp.eq.s32.totalorder %s29, 1
      %p118 = por %p116, %p117
      %p120 = scmp.ne.s32.totalorder %s103, %s119
      %p121 = scmp.eq.s32.totalorder %s29, 0
      %p122 = por %p120, %p121
      %s124 = sadd.s32 %s123, 1
      %p127 = scmp.eq.s32.totalorder %s23, 1
      %p128 = scmp.ne.s32.totalorder %s123, %s125
      %p129 = scmp.eq.s32.totalorder %s23, 0
      %p130 = por %p128, %p129
      %p131 = scmp.ne.s32.totalorder %s123, %s125
      %p132 = scmp.eq.s32.totalorder %s28, 1
      %p133 = por %p131, %p132
      %p134 = scmp.ne.s32.totalorder %s125, %s126
      %p135 = scmp.eq.s32.totalorder %s28, 0
      %p136 = por %p134, %p135
      %p137 = scmp.ne.s32.totalorder %s125, %s126
      %p138 = scmp.eq.s32.totalorder %s29, 1
      %p139 = por %p137, %p138
      %p141 = scmp.ne.s32.totalorder %s126, %s140
      %p142 = scmp.eq.s32.totalorder %s29, 0
      %p143 = por %p141, %p142
      %s145 = sadd.s32 %s144, 1
      %p148 = scmp.eq.s32.totalorder %s23, 1
      %p149 = scmp.ne.s32.totalorder %s144, %s146
      %p150 = scmp.eq.s32.totalorder %s23, 0
      %p151 = por %p149, %p150
      %p152 = scmp.ne.s32.totalorder %s144, %s146
      %p153 = scmp.eq.s32.totalorder %s28, 1
      %p154 = por %p152, %p153
      %p155 = scmp.ne.s32.totalorder %s146, %s147
      %p156 = scmp.eq.s32.totalorder %s28, 0
      %p157 = por %p155, %p156
      %p158 = scmp.ne.s32.totalorder %s146, %s147
      %p159 = scmp.eq.s32.totalorder %s29, 1
      %p160 = por %p158, %p159
      %p162 = scmp.ne.s32.totalorder %s147, %s161
      %p163 = scmp.eq.s32.totalorder %s29, 0
      %p164 = por %p162, %p163
      %s166 = sadd.s32 %s165, 1
      %p169 = scmp.eq.s32.totalorder %s23, 1
      %p170 = scmp.ne.s32.totalorder %s165, %s167
      %p171 = scmp.eq.s32.totalorder %s23, 0
      %p172 = por %p170, %p171
      %p173 = scmp.ne.s32.totalorder %s165, %s167
      %p174 = scmp.eq.s32.totalorder %s28, 1
      %p175 = por %p173, %p174
      %p176 = scmp.ne.s32.totalorder %s167, %s168
      %p177 = scmp.eq.s32.totalorder %s28, 0
      %p178 = por %p176, %p177
      %p179 = scmp.ne.s32.totalorder %s167, %s168
      %p180 = scmp.eq.s32.totalorder %s29, 1
      %p181 = por %p179, %p180
      %p183 = scmp.ne.s32.totalorder %s168, %s182
      %p184 = scmp.eq.s32.totalorder %s29, 0
      %p185 = por %p183, %p184
      %s187 = sadd.s32 %s186, 1
      %p190 = scmp.eq.s32.totalorder %s23, 1
      %p191 = scmp.ne.s32.totalorder %s186, %s188
      %p192 = scmp.eq.s32.totalorder %s23, 0
      %p193 = por %p191, %p192
      %p194 = scmp.ne.s32.totalorder %s186, %s188
      %p195 = scmp.eq.s32.totalorder %s28, 1
      %p196 = por %p194, %p195
      %p197 = scmp.ne.s32.totalorder %s188, %s189
      %p198 = scmp.eq.s32.totalorder %s28, 0
      %p199 = por %p197, %p198
      %p200 = scmp.ne.s32.totalorder %s188, %s189
      %p201 = scmp.eq.s32.totalorder %s29, 1
      %p202 = por %p200, %p201
      %p204 = scmp.ne.s32.totalorder %s189, %s203
      %p205 = scmp.eq.s32.totalorder %s29, 0
      %p206 = por %p204, %p205
      %s208 = sadd.s32 %s207, 1
      %p211 = scmp.eq.s32.totalorder %s23, 1
      %p212 = scmp.ne.s32.totalorder %s207, %s209
      %p213 = scmp.eq.s32.totalorder %s23, 0
      %p214 = por %p212, %p213
      %p215 = scmp.ne.s32.totalorder %s207, %s209
      %p216 = scmp.eq.s32.totalorder %s28, 1
      %p217 = por %p215, %p216
      %p218 = scmp.ne.s32.totalorder %s209, %s210
      %p219 = scmp.eq.s32.totalorder %s28, 0
      %p220 = por %p218, %p219
      %p221 = scmp.ne.s32.totalorder %s209, %s210
      %p222 = scmp.eq.s32.totalorder %s29, 1
      %p223 = por %p221, %p222
      %p225 = scmp.ne.s32.totalorder %s210, %s224
      %p226 = scmp.eq.s32.totalorder %s29, 0
      %p227 = por %p225, %p226
      %s229 = sadd.s32 %s228, 1
      %p232 = scmp.eq.s32.totalorder %s23, 1
      %p233 = scmp.ne.s32.totalorder %s228, %s230
      %p234 = scmp.eq.s32.totalorder %s23, 0
      %p235 = por %p233, %p234
      %p236 = scmp.ne.s32.totalorder %s228, %s230
      %p237 = scmp.eq.s32.totalorder %s28, 1
      %p238 = por %p236, %p237
      %p239 = scmp.ne.s32.totalorder %s230, %s231
      %p240 = scmp.eq.s32.totalorder %s28, 0
      %p241 = por %p239, %p240
      %p242 = scmp.ne.s32.totalorder %s230, %s231
      %p243 = scmp.eq.s32.totalorder %s29, 1
      %p244 = por %p242, %p243
      %p246 = scmp.ne.s32.totalorder %s231, %s245
      %p247 = scmp.eq.s32.totalorder %s29, 0
      %p248 = por %p246, %p247
      %s250 = sadd.s32 %s249, 1
      %p253 = scmp.eq.s32.totalorder %s23, 1
      %p254 = scmp.ne.s32.totalorder %s249, %s251
      %p255 = scmp.eq.s32.totalorder %s23, 0
      %p256 = por %p254, %p255
      %p257 = scmp.ne.s32.totalorder %s249, %s251
      %p258 = scmp.eq.s32.totalorder %s28, 1
      %p259 = por %p257, %p258
      %p260 = scmp.ne.s32.totalorder %s251, %s252
      %p261 = scmp.eq.s32.totalorder %s28, 0
      %p262 = por %p260, %p261
      %p263 = scmp.ne.s32.totalorder %s251, %s252
      %p264 = scmp.eq.s32.totalorder %s29, 1
      %p265 = por %p263, %p264
      %p267 = scmp.ne.s32.totalorder %s252, %s266
      %p268 = scmp.eq.s32.totalorder %s29, 0
      %p269 = por %p267, %p268
      %s271 = sadd.s32 %s270, 1
      %p274 = scmp.eq.s32.totalorder %s23, 1
      %p275 = scmp.ne.s32.totalorder %s270, %s272
      %p276 = scmp.eq.s32.totalorder %s23, 0
      %p277 = por %p275, %p276
      %p278 = scmp.ne.s32.totalorder %s270, %s272
      %p279 = scmp.eq.s32.totalorder %s28, 1
      %p280 = por %p278, %p279
      %p281 = scmp.ne.s32.totalorder %s272, %s273
      %p282 = scmp.eq.s32.totalorder %s28, 0
      %p283 = por %p281, %p282
      %p284 = scmp.ne.s32.totalorder %s272, %s273
      %p285 = scmp.eq.s32.totalorder %s29, 1
      %p286 = por %p284, %p285
      %p288 = scmp.ne.s32.totalorder %s273, %s287
      %p289 = scmp.eq.s32.totalorder %s29, 0
      %p290 = por %p288, %p289
      %s292 = sadd.s32 %s291, 1
      %p295 = scmp.eq.s32.totalorder %s23, 1
      %p296 = scmp.ne.s32.totalorder %s291, %s293
      %p297 = scmp.eq.s32.totalorder %s23, 0
      %p298 = por %p296, %p297
      %p299 = scmp.ne.s32.totalorder %s291, %s293
      %p300 = scmp.eq.s32.totalorder %s28, 1
      %p301 = por %p299, %p300
      %p302 = scmp.ne.s32.totalorder %s293, %s294
      %p303 = scmp.eq.s32.totalorder %s28, 0
      %p304 = por %p302, %p303
      %p305 = scmp.ne.s32.totalorder %s293, %s294
      %p306 = scmp.eq.s32.totalorder %s29, 1
      %p307 = por %p305, %p306
      %p309 = scmp.ne.s32.totalorder %s294, %s308
      %p310 = scmp.eq.s32.totalorder %s29, 0
      %p311 = por %p309, %p310
      %s313 = sadd.s32 %s312, 1
      %p316 = scmp.eq.s32.totalorder %s23, 1
      %p317 = scmp.ne.s32.totalorder %s312, %s314
      %p318 = scmp.eq.s32.totalorder %s23, 0
      %p319 = por %p317, %p318
      %p320 = scmp.ne.s32.totalorder %s312, %s314
      %p321 = scmp.eq.s32.totalorder %s28, 1
      %p322 = por %p320, %p321
      %p323 = scmp.ne.s32.totalorder %s314, %s315
      %p324 = scmp.eq.s32.totalorder %s28, 0
      %p325 = por %p323, %p324
      %p326 = scmp.ne.s32.totalorder %s314, %s315
      %p327 = scmp.eq.s32.totalorder %s29, 1
      %p328 = por %p326, %p327
      %p330 = scmp.ne.s32.totalorder %s315, %s329
      %p331 = scmp.eq.s32.totalorder %s29, 0
      %p332 = por %p330, %p331
      %s333 = ssub.s32 %s31, %s38
      %s334 = ssub.s32 %s30, %s42
      %s335 = sor.u32 %s333, %s334
      %p336 = scmp.eq.s32.totalorder %s335, 0
      %s338 = sadd.s32 %s337, 1
      %s339 = scalar_select %p336, %s337, %s338
      %p342 = pneg %p336
      %p343 = scmp.eq.s32.totalorder %s23, 1
      %p344 = por %p342, %p343
      %p345 = scmp.ne.s32.totalorder %s337, %s340
      %p346 = scmp.eq.s32.totalorder %s23, 0
      %p347 = por %p345, %p346
      %p348 = scmp.ne.s32.totalorder %s337, %s340
      %p349 = scmp.eq.s32.totalorder %s28, 1
      %p350 = por %p348, %p349
      %p351 = scmp.ne.s32.totalorder %s340, %s341
      %p352 = scmp.eq.s32.totalorder %s28, 0
      %p353 = por %p351, %p352
      %p354 = scmp.ne.s32.totalorder %s340, %s341
      %p355 = scmp.eq.s32.totalorder %s29, 1
      %p356 = por %p354, %p355
      %p358 = scmp.ne.s32.totalorder %s341, %s357
      %p359 = scmp.eq.s32.totalorder %s29, 0
      %p360 = por %p358, %p359
      %p361 = scmp.le.s32.totalorder 1, %s23
      %p362 = scmp.lt.s32.totalorder %s23, 3
      %p363 = pnand %p361, %p362
      %p364 = pneg %p363
      // Predicated region
      $region9: #{tpu_custom_call.1} parent=5 // pred_check
        _
      $region10: #{tpu_custom_call.1} parent=5 // pred_check_branch
        %366 = sbr.rel (%p363) target = $region12
      $region11: #{tpu_custom_call.1} parent=5 // pred_region
        %s367 = ssub.s32 %s23, 1
        // Predicated region
        $region13: #{tpu_custom_call.1} parent=11 // pred_check
          %p368 = pneg %p89
        $region14: #{tpu_custom_call.1} parent=11 // pred_check_branch
          %370 = sbr.rel (%p368) target = $region16
        $region15: #{tpu_custom_call.1} parent=11 // pred_region
          %p371 = scmp.lt.s32.totalorder %s32, 0
          %s372 = scalar_select %p371, %s32, 0
          %s373 = scalar_lea.vmem %s1, %s372
        $region16: #{tpu_custom_call.1} parent=11 // pred_fallthru
          _
        // Predicated region
        $region17: #{tpu_custom_call.1} parent=11 // pred_check
          %p374 = pneg %p136
        $region18: #{tpu_custom_call.1} parent=11 // pred_check_branch
          %376 = sbr.rel (%p374) target = $region20
        $region19: #{tpu_custom_call.1} parent=11 // pred_region
          _
        $region20: #{tpu_custom_call.1} parent=11 // pred_fallthru
          _
        // Predicated region
        $region21: #{tpu_custom_call.1} parent=11 // pred_check
          %p377 = pneg %p157
        $region22: #{tpu_custom_call.1} parent=11 // pred_check_branch
          %379 = sbr.rel (%p377) target = $region24
        $region23: #{tpu_custom_call.1} parent=11 // pred_region
          _
        $region24: #{tpu_custom_call.1} parent=11 // pred_fallthru
          _
        // Predicated region
        $region25: #{tpu_custom_call.1} parent=11 // pred_check
          %p380 = pneg %p178
        $region26: #{tpu_custom_call.1} parent=11 // pred_check_branch
          %382 = sbr.rel (%p380) target = $region28
        $region27: #{tpu_custom_call.1} parent=11 // pred_region
          _
        $region28: #{tpu_custom_call.1} parent=11 // pred_fallthru
          _
        // Predicated region
        $region29: #{tpu_custom_call.1} parent=11 // pred_check
          %p383 = pneg %p199
        $region30: #{tpu_custom_call.1} parent=11 // pred_check_branch
          %385 = sbr.rel (%p383) target = $region32
        $region31: #{tpu_custom_call.1} parent=11 // pred_region
          _
        $region32: #{tpu_custom_call.1} parent=11 // pred_fallthru
          _
        // Predicated region
        $region33: #{tpu_custom_call.1} parent=11 // pred_check
          %p386 = pneg %p220
        $region34: #{tpu_custom_call.1} parent=11 // pred_check_branch
          %388 = sbr.rel (%p386) target = $region36
        $region35: #{tpu_custom_call.1} parent=11 // pred_region
          _
        $region36: #{tpu_custom_call.1} parent=11 // pred_fallthru
          _
        // Predicated region
        $region37: #{tpu_custom_call.1} parent=11 // pred_check
          %p389 = pneg %p241
        $region38: #{tpu_custom_call.1} parent=11 // pred_check_branch
          %391 = sbr.rel (%p389) target = $region40
        $region39: #{tpu_custom_call.1} parent=11 // pred_region
          _
        $region40: #{tpu_custom_call.1} parent=11 // pred_fallthru
          _
        // Predicated region
        $region41: #{tpu_custom_call.1} parent=11 // pred_check
          %p392 = pneg %p262
        $region42: #{tpu_custom_call.1} parent=11 // pred_check_branch
          %394 = sbr.rel (%p392) target = $region44
        $region43: #{tpu_custom_call.1} parent=11 // pred_region
          _
        $region44: #{tpu_custom_call.1} parent=11 // pred_fallthru
          _
        // Predicated region
        $region45: #{tpu_custom_call.1} parent=11 // pred_check
          %p395 = pneg %p283
        $region46: #{tpu_custom_call.1} parent=11 // pred_check_branch
          %397 = sbr.rel (%p395) target = $region48
        $region47: #{tpu_custom_call.1} parent=11 // pred_region
          _
        $region48: #{tpu_custom_call.1} parent=11 // pred_fallthru
          _
        // Predicated region
        $region49: #{tpu_custom_call.1} parent=11 // pred_check
          %p398 = pneg %p304
        $region50: #{tpu_custom_call.1} parent=11 // pred_check_branch
          %400 = sbr.rel (%p398) target = $region52
        $region51: #{tpu_custom_call.1} parent=11 // pred_region
          _
        $region52: #{tpu_custom_call.1} parent=11 // pred_fallthru
          _
        // Predicated region
        $region53: #{tpu_custom_call.1} parent=11 // pred_check
          %p401 = pneg %p325
        $region54: #{tpu_custom_call.1} parent=11 // pred_check_branch
          %403 = sbr.rel (%p401) target = $region56
        $region55: #{tpu_custom_call.1} parent=11 // pred_region
          _
        $region56: #{tpu_custom_call.1} parent=11 // pred_fallthru
          _
      $region12: #{tpu_custom_call.1} parent=5 // pred_fallthru
        _
      %p404 = scmp.lt.s32.totalorder %s23, 2
      // Predicated region
      $region57: #{tpu_custom_call.1} parent=5 // pred_check
        %p405 = pneg %p404
      $region58: #{tpu_custom_call.1} parent=5 // pred_check_branch
        %407 = sbr.rel (%p405) target = $region60
      $region59: #{tpu_custom_call.1} parent=5 // pred_region
        // Predicated region
        $region61: #{tpu_custom_call.1} parent=59 // pred_check
          %p408 = pneg %p57
        $region62: #{tpu_custom_call.1} parent=59 // pred_check_branch
          %410 = sbr.rel (%p408) target = $region64
        $region63: #{tpu_custom_call.1} parent=59 // pred_region
          %p411 = scmp.lt.s32.totalorder %s31, 1
          %s412 = scalar_select %p411, %s31, 1
          %p413 = scmp.lt.s32.totalorder %s30, 0
          %s414 = scalar_select %p413, %s30, 0
          %s415 = sadd.s32 %s414, %s412
          %s416 = smul.addr %s415, 8
          %s417 = scalar_lea.vmem %s0, %s416
        $region64: #{tpu_custom_call.1} parent=59 // pred_fallthru
          _
        // Predicated region
        $region65: #{tpu_custom_call.1} parent=59 // pred_check
          %p418 = pneg %p109
        $region66: #{tpu_custom_call.1} parent=59 // pred_check_branch
          %420 = sbr.rel (%p418) target = $region68
        $region67: #{tpu_custom_call.1} parent=59 // pred_region
          %p421 = scmp.lt.s32.totalorder %s31, 1
          %s422 = scalar_select %p421, %s31, 1
          %s423 = smul.addr %s422, 4
          %s424 = smul.addr %s423, 8
          %s425 = scalar_lea.vmem %s2, %s424
        $region68: #{tpu_custom_call.1} parent=59 // pred_fallthru
          _
      $region60: #{tpu_custom_call.1} parent=5 // pred_fallthru
        _
      %p426 = scmp.le.s32.totalorder 1, %s23
      %p427 = scmp.lt.s32.totalorder %s23, 3
      %p428 = pnand %p426, %p427
      %p429 = pneg %p428
      // Predicated region
      $region69: #{tpu_custom_call.1} parent=5 // pred_check
        _
      $region70: #{tpu_custom_call.1} parent=5 // pred_check_branch
        %431 = sbr.rel (%p428) target = $region72
      $region71: #{tpu_custom_call.1} parent=5 // pred_region
        %s432 = ssub.s32 %s23, 1
        %p433 = scmp.lt.s32.totalorder %s33, 1
        %s434 = scalar_select %p433, %s33, 1
        %p435 = scmp.lt.s32.totalorder %s32, 0
        %s436 = scalar_select %p435, %s32, 0
        %s437 = sadd.s32 %s436, %s434
        %s438 = smul.addr %s437, 8
        %s439 = scalar_lea.vmem %s0, %s438
        %p440 = pneg %p63
        %p441 = pneg %p60
        %p442 = scmp.lt.s32.totalorder %s32, 0
        %s443 = scalar_select %p442, %s32, 0
        %s444 = scalar_lea.vmem %s1, %s443
        %p445 = pneg %p89
        %p446 = pneg %p86
        %p447 = scmp.lt.s32.totalorder %s33, 1
        %s448 = scalar_select %p447, %s33, 1
        %s449 = smul.addr %s448, 4
        %s450 = smul.addr %s449, 8
        %s451 = scalar_lea.vmem %s2, %s450
        %p452 = pneg %p115
        %p453 = pneg %p112
        %p454 = pneg %p136
        %p455 = pneg %p133
        %p456 = pneg %p157
        %p457 = pneg %p154
        %p458 = pneg %p178
        %p459 = pneg %p175
        %p460 = pneg %p199
        %p461 = pneg %p196
        %p462 = pneg %p220
        %p463 = pneg %p217
        %p464 = pneg %p241
        %p465 = pneg %p238
        %p466 = pneg %p262
        %p467 = pneg %p259
        %p468 = pneg %p283
        %p469 = pneg %p280
        %p470 = pneg %p304
        %p471 = pneg %p301
        %p472 = pneg %p325
        %p473 = pneg %p322
        %p474 = pneg %p353
        %p475 = pneg %p350
        %s476 = sand.u32 %s340, 1
        %s477 = scalar_lea.sflag [#allocation5], %s476
        %s478 = sand.u32 %s340, 1
        %s479 = scalar_lea.vmem [#allocation4], %s478
        %p480 = scmp.lt.s32.totalorder %s33, 1
        %s481 = scalar_select %p480, %s33, 1
        %p482 = scmp.lt.s32.totalorder %s32, 0
        %s483 = scalar_select %p482, %s32, 0
        %s484 = sadd.s32 %s483, %s481
        %s485 = smul.addr %s484, 8
        %s486 = scalar_lea.vmem %s0, %s485
        %p487 = scmp.lt.s32.totalorder %s32, 0
        %s488 = scalar_select %p487, %s32, 0
        %s489 = scalar_lea.vmem %s1, %s488
        %p490 = scmp.lt.s32.totalorder %s33, 1
        %s491 = scalar_select %p490, %s33, 1
        %s492 = smul.addr %s491, 4
        %s493 = smul.addr %s492, 8
        %s494 = scalar_lea.vmem %s2, %s493
        %v495 = vld [vmem:[%s486] sm:$0xff]
        %v496 = vld [vmem:[%s3] sm:$0xff]
        %v497 = vld [vmem:[%s3 + $0x8] sm:$0xff]
        %v498 = vld [vmem:[%s3 + $0x10] sm:$0xff]
        %v499 = vld [vmem:[%s3 + $0x18] sm:$0xff]
        %v500 = vld [vmem:[%s494] sm:$0xff]
        %v501 = vld [vmem:[%s494 + $0x8] sm:$0xff]
        %v502 = vld [vmem:[%s494 + $0x10] sm:$0xff]
        %v503 = vld [vmem:[%s494 + $0x18] sm:$0xff]
        %505 = vset.pattern.permute.xlu0 0
        %506 = vperm.xlu0 %505, %v500
        %v507 = vpop.permute.xlu0 %506
        %510 = vset.pattern.permute.xlu0 0
        %511 = vperm.xlu0 %510, %v501
        %v512 = vpop.permute.xlu0 %511
        %515 = vset.pattern.permute.xlu0 0
        %516 = vperm.xlu0 %515, %v502
        %v517 = vpop.permute.xlu0 %516
        %520 = vset.pattern.permute.xlu0 0
        %521 = vperm.xlu0 %520, %v503
        %v522 = vpop.permute.xlu0 %521
        %vm524 = vcmask 64512
        %v526 = vsel %vm524, %v496, 0
        %v529 = vsel %vm524, %v497, 0
        %v532 = vsel %vm524, %v498, 0
        %v535 = vsel %vm524, %v499, 0
        %537 = vmatprep.subr.mxu0 0.0
        %538 = vmatpush1.msra.mxu0 %v495
        %539 = vmatprep.subr.mxu0 0.0
        %540 = vmatpush1.msra.mxu0 0.0
        %541 = vmatprep.subr.mxu0 0.0
        %542 = vmatpush1.msra.mxu0 0.0
        %543 = vmatprep.subr.mxu0 0.0
        %544 = vmatpush1.msra.mxu0 0.0
        %545 = vmatprep.subr.mxu0 0.0
        %546 = vmatpush1.msra.mxu0 0.0
        %547 = vmatprep.subr.mxu0 0.0
        %548 = vmatpush1.msra.mxu0 0.0
        %549 = vmatprep.subr.mxu0 0.0
        %550 = vmatpush1.msra.mxu0 0.0
        %551 = vmatprep.subr.mxu0 0.0
        %552 = vmatpush1.msra.mxu0 0.0
        %553 = vmatprep.subr.mxu0 0.0
        %554 = vmatpush1.msra.mxu0 0.0
        %555 = vmatprep.subr.mxu0 0.0
        %556 = vmatpush1.msra.mxu0 0.0
        %557 = vmatprep.subr.mxu0 0.0
        %558 = vmatpush1.msra.mxu0 0.0
        %559 = vmatprep.subr.mxu0 0.0
        %560 = vmatpush1.msra.mxu0 0.0
        %561 = vmatprep.subr.mxu0 0.0
        %562 = vmatpush1.msra.mxu0 0.0
        %563 = vmatprep.subr.mxu0 0.0
        %564 = vmatpush1.msra.mxu0 0.0
        %565 = vmatprep.subr.mxu0 0.0
        %566 = vmatpush1.msra.mxu0 0.0
        %567 = vmatprep.subr.mxu0 0.0
        %568 = vmatpush1.msra.mxu0 0.0
        %569 = vmatprep.subr.mxu0 0.0
        %570 = vmatpush1.msra.mxu0 0.0
        %571 = vmatprep.subr.mxu0 0.0
        %572 = vmatpush1.msra.mxu0 0.0
        %573 = vmatprep.subr.mxu0 0.0
        %574 = vmatpush1.msra.mxu0 0.0
        %575 = vmatprep.subr.mxu0 0.0
        %576 = vmatpush1.msra.mxu0 0.0
        %577 = vmatprep.subr.mxu0 0.0
        %578 = vmatpush1.msra.mxu0 0.0
        %579 = vmatprep.subr.mxu0 0.0
        %580 = vmatpush1.msra.mxu0 0.0
        %581 = vmatprep.subr.mxu0 0.0
        %582 = vmatpush1.msra.mxu0 0.0
        %583 = vmatprep.subr.mxu0 0.0
        %584 = vmatpush1.msra.mxu0 0.0
        %585 = vmatprep.subr.mxu0 0.0
        %586 = vmatpush1.msra.mxu0 0.0
        %587 = vmatprep.subr.mxu0 0.0
        %588 = vmatpush1.msra.mxu0 0.0
        %589 = vmatprep.subr.mxu0 0.0
        %590 = vmatpush1.msra.mxu0 0.0
        %591 = vmatprep.subr.mxu0 0.0
        %592 = vmatpush1.msra.mxu0 0.0
        %593 = vmatprep.subr.mxu0 0.0
        %594 = vmatpush1.msra.mxu0 0.0
        %595 = vmatprep.subr.mxu0 0.0
        %596 = vmatpush1.msra.mxu0 0.0
        %597 = vmatprep.subr.mxu0 0.0
        %598 = vmatpush1.msra.mxu0 0.0
        %599 = vmatprep.subr.mxu0 0.0
        %600 = vmatpush1.msra.mxu0 0.0
        %601 = vmatprep.mubr.f32.mxu0 0.0
        %602 = vmatmul.mubr.f32.gmra.mrb[0].mxu0 %v526
        %v603 = vpop.f32.mrb[0].mxu0
        %v604 = vadd.f32 %v507, %v603
        %v605 = vpop.f32.mrb[0].mxu0
        %606 = vmatprep.mubr.f32.mxu0 0.0
        %607 = vmatmul.mubr.f32.gmra.mrb[0].mxu0 %v529
        %v608 = vpop.f32.mrb[0].mxu0
        %v609 = vadd.f32 %v512, %v608
        %v610 = vpop.f32.mrb[0].mxu0
        %611 = vmatprep.mubr.f32.mxu0 0.0
        %612 = vmatmul.mubr.f32.gmra.mrb[0].mxu0 %v532
        %v613 = vpop.f32.mrb[0].mxu0
        %v614 = vadd.f32 %v517, %v613
        %v615 = vpop.f32.mrb[0].mxu0
        %616 = vmatprep.mubr.f32.mxu0 0.0
        %617 = vmatmul.mubr.f32.gmra.mrb[0].mxu0 %v535
        %v618 = vpop.f32.mrb[0].mxu0
        %v619 = vadd.f32 %v522, %v618
        %v620 = vpop.f32.mrb[0].mxu0
        %621 = vdwg.mxu0
        %v622 = vtanh.pop %v604
        %v623 = vtanh.pop %v609
        %v624 = vtanh.pop %v614
        %v625 = vtanh.pop %v619
        %v626 = vld [vmem:[%s4] sm:$0xff]
        %v627 = vld [vmem:[%s4 + $0x8] sm:$0xff]
        %v628 = vld [vmem:[%s4 + $0x10] sm:$0xff]
        %v629 = vld [vmem:[%s4 + $0x18] sm:$0xff]
        %v630 = vld [vmem:[%s5] sm:$0xff]
        %v631 = vld [vmem:[%s5 + $0x8] sm:$0xff]
        %v632 = vld [vmem:[%s5 + $0x10] sm:$0xff]
        %v633 = vld [vmem:[%s5 + $0x18] sm:$0xff]
        %635 = vset.pattern.permute.xlu0 0
        %636 = vperm.xlu0 %635, %v630
        %v637 = vpop.permute.xlu0 %636
        %640 = vset.pattern.permute.xlu0 0
        %641 = vperm.xlu0 %640, %v631
        %v642 = vpop.permute.xlu0 %641
        %645 = vset.pattern.permute.xlu0 0
        %646 = vperm.xlu0 %645, %v632
        %v647 = vpop.permute.xlu0 %646
        %650 = vset.pattern.permute.xlu0 0
        %651 = vperm.xlu0 %650, %v633
        %v652 = vpop.permute.xlu0 %651
        %vm654 = vcmask 261120
        %v656 = vsel %vm654, %v626, 0
        %v659 = vsel %vm654, %v627, 0
        %v662 = vsel %vm654, %v628, 0
        %v665 = vsel %vm654, %v629, 0
        %667 = vmatprep.subr.mxu0 0.0
        %668 = vmatpush1.msra.mxu0 %v622
        %669 = vmatprep.subr.mxu0 0.0
        %670 = vmatpush1.msra.mxu0 %v623
        %671 = vmatprep.subr.mxu0 0.0
        %672 = vmatpush1.msra.mxu0 %v624
        %673 = vmatprep.subr.mxu0 0.0
        %674 = vmatpush1.msra.mxu0 %v625
        %675 = vmatprep.subr.mxu0 0.0
        %676 = vmatpush1.msra.mxu0 0.0
        %677 = vmatprep.subr.mxu0 0.0
        %678 = vmatpush1.msra.mxu0 0.0
        %679 = vmatprep.subr.mxu0 0.0
        %680 = vmatpush1.msra.mxu0 0.0
        %681 = vmatprep.subr.mxu0 0.0
        %682 = vmatpush1.msra.mxu0 0.0
        %683 = vmatprep.subr.mxu0 0.0
        %684 = vmatpush1.msra.mxu0 0.0
        %685 = vmatprep.subr.mxu0 0.0
        %686 = vmatpush1.msra.mxu0 0.0
        %687 = vmatprep.subr.mxu0 0.0
        %688 = vmatpush1.msra.mxu0 0.0
        %689 = vmatprep.subr.mxu0 0.0
        %690 = vmatpush1.msra.mxu0 0.0
        %691 = vmatprep.subr.mxu0 0.0
        %692 = vmatpush1.msra.mxu0 0.0
        %693 = vmatprep.subr.mxu0 0.0
        %694 = vmatpush1.msra.mxu0 0.0
        %695 = vmatprep.subr.mxu0 0.0
        %696 = vmatpush1.msra.mxu0 0.0
        %697 = vmatprep.subr.mxu0 0.0
        %698 = vmatpush1.msra.mxu0 0.0
        %699 = vmatprep.subr.mxu0 0.0
        %700 = vmatpush1.msra.mxu0 0.0
        %701 = vmatprep.subr.mxu0 0.0
        %702 = vmatpush1.msra.mxu0 0.0
        %703 = vmatprep.subr.mxu0 0.0
        %704 = vmatpush1.msra.mxu0 0.0
        %705 = vmatprep.subr.mxu0 0.0
        %706 = vmatpush1.msra.mxu0 0.0
        %707 = vmatprep.subr.mxu0 0.0
        %708 = vmatpush1.msra.mxu0 0.0
        %709 = vmatprep.subr.mxu0 0.0
        %710 = vmatpush1.msra.mxu0 0.0
        %711 = vmatprep.subr.mxu0 0.0
        %712 = vmatpush1.msra.mxu0 0.0
        %713 = vmatprep.subr.mxu0 0.0
        %714 = vmatpush1.msra.mxu0 0.0
        %715 = vmatprep.subr.mxu0 0.0
        %716 = vmatpush1.msra.mxu0 0.0
        %717 = vmatprep.subr.mxu0 0.0
        %718 = vmatpush1.msra.mxu0 0.0
        %719 = vmatprep.subr.mxu0 0.0
        %720 = vmatpush1.msra.mxu0 0.0
        %721 = vmatprep.subr.mxu0 0.0
        %722 = vmatpush1.msra.mxu0 0.0
        %723 = vmatprep.subr.mxu0 0.0
        %724 = vmatpush1.msra.mxu0 0.0
        %725 = vmatprep.subr.mxu0 0.0
        %726 = vmatpush1.msra.mxu0 0.0
        %727 = vmatprep.subr.mxu0 0.0
        %728 = vmatpush1.msra.mxu0 0.0
        %729 = vmatprep.subr.mxu0 0.0
        %730 = vmatpush1.msra.mxu0 0.0
        %731 = vmatprep.mubr.f32.mxu0 0.0
        %732 = vmatmul.mubr.f32.gmra.mrb[0].mxu0 %v656
        %v733 = vpop.f32.mrb[0].mxu0
        %v734 = vadd.f32 %v637, %v733
        %v735 = vpop.f32.mrb[0].mxu0
        %736 = vmatprep.mubr.f32.mxu0 0.0
        %737 = vmatmul.mubr.f32.gmra.mrb[0].mxu0 %v659
        %v738 = vpop.f32.mrb[0].mxu0
        %v739 = vadd.f32 %v642, %v738
        %v740 = vpop.f32.mrb[0].mxu0
        %741 = vmatprep.mubr.f32.mxu0 0.0
        %742 = vmatmul.mubr.f32.gmra.mrb[0].mxu0 %v662
        %v743 = vpop.f32.mrb[0].mxu0
        %v744 = vadd.f32 %v647, %v743
        %v745 = vpop.f32.mrb[0].mxu0
        %746 = vmatprep.mubr.f32.mxu0 0.0
        %747 = vmatmul.mubr.f32.gmra.mrb[0].mxu0 %v665
        %v748 = vpop.f32.mrb[0].mxu0
        %v749 = vadd.f32 %v652, %v748
        %v750 = vpop.f32.mrb[0].mxu0
        %751 = vdwg.mxu0
        %v752 = vtanh.pop %v734
        %v753 = vtanh.pop %v739
        %v754 = vtanh.pop %v744
        %v755 = vtanh.pop %v749
        %v756 = vld [vmem:[%s6] sm:$0xf]
        %v757 = vld [vmem:[%s7] sm:$0xf]
        %759 = vset.pattern.permute.xlu0 0
        %760 = vperm.xlu0 %759, %v757
        %v761 = vpop.permute.xlu0 %760
        %v764 = vsel %vm654, %v756, 0
        %766 = vmatprep.subr.mxu0 0.0
        %767 = vmatpush1.msra.mxu0 %v752
        %768 = vmatprep.subr.mxu0 0.0
        %769 = vmatpush1.msra.mxu0 %v753
        %770 = vmatprep.subr.mxu0 0.0
        %771 = vmatpush1.msra.mxu0 %v754
        %772 = vmatprep.subr.mxu0 0.0
        %773 = vmatpush1.msra.mxu0 %v755
        %774 = vmatprep.subr.mxu0 0.0
        %775 = vmatpush1.msra.mxu0 0.0
        %776 = vmatprep.subr.mxu0 0.0
        %777 = vmatpush1.msra.mxu0 0.0
        %778 = vmatprep.subr.mxu0 0.0
        %779 = vmatpush1.msra.mxu0 0.0
        %780 = vmatprep.subr.mxu0 0.0
        %781 = vmatpush1.msra.mxu0 0.0
        %782 = vmatprep.subr.mxu0 0.0
        %783 = vmatpush1.msra.mxu0 0.0
        %784 = vmatprep.subr.mxu0 0.0
        %785 = vmatpush1.msra.mxu0 0.0
        %786 = vmatprep.subr.mxu0 0.0
        %787 = vmatpush1.msra.mxu0 0.0
        %788 = vmatprep.subr.mxu0 0.0
        %789 = vmatpush1.msra.mxu0 0.0
        %790 = vmatprep.subr.mxu0 0.0
        %791 = vmatpush1.msra.mxu0 0.0
        %792 = vmatprep.subr.mxu0 0.0
        %793 = vmatpush1.msra.mxu0 0.0
        %794 = vmatprep.subr.mxu0 0.0
        %795 = vmatpush1.msra.mxu0 0.0
        %796 = vmatprep.subr.mxu0 0.0
        %797 = vmatpush1.msra.mxu0 0.0
        %798 = vmatprep.subr.mxu0 0.0
        %799 = vmatpush1.msra.mxu0 0.0
        %800 = vmatprep.subr.mxu0 0.0
        %801 = vmatpush1.msra.mxu0 0.0
        %802 = vmatprep.subr.mxu0 0.0
        %803 = vmatpush1.msra.mxu0 0.0
        %804 = vmatprep.subr.mxu0 0.0
        %805 = vmatpush1.msra.mxu0 0.0
        %806 = vmatprep.subr.mxu0 0.0
        %807 = vmatpush1.msra.mxu0 0.0
        %808 = vmatprep.subr.mxu0 0.0
        %809 = vmatpush1.msra.mxu0 0.0
        %810 = vmatprep.subr.mxu0 0.0
        %811 = vmatpush1.msra.mxu0 0.0
        %812 = vmatprep.subr.mxu0 0.0
        %813 = vmatpush1.msra.mxu0 0.0
        %814 = vmatprep.subr.mxu0 0.0
        %815 = vmatpush1.msra.mxu0 0.0
        %816 = vmatprep.subr.mxu0 0.0
        %817 = vmatpush1.msra.mxu0 0.0
        %818 = vmatprep.subr.mxu0 0.0
        %819 = vmatpush1.msra.mxu0 0.0
        %820 = vmatprep.subr.mxu0 0.0
        %821 = vmatpush1.msra.mxu0 0.0
        %822 = vmatprep.subr.mxu0 0.0
        %823 = vmatpush1.msra.mxu0 0.0
        %824 = vmatprep.subr.mxu0 0.0
        %825 = vmatpush1.msra.mxu0 0.0
        %826 = vmatprep.subr.mxu0 0.0
        %827 = vmatpush1.msra.mxu0 0.0
        %828 = vmatprep.subr.mxu0 0.0
        %829 = vmatpush1.msra.mxu0 0.0
        %830 = vmatprep.mubr.f32.mxu0 0.0
        %831 = vmatmul.mubr.f32.gmra.mrb[0].mxu0 %v764
        %v832 = vpop.f32.mrb[0].mxu0
        %v833 = vadd.f32 %v761, %v832
        %v834 = vpop.f32.mrb[0].mxu0
        %835 = vdwg.mxu0
        %p836 = scmp.eq.s32.totalorder %s33, 0
        // Predicated region
        $region73: #{tpu_custom_call.1} parent=71 // pred_check
          %p837 = pneg %p836
        $region74: #{tpu_custom_call.1} parent=71 // pred_check_branch
          %839 = sbr.rel (%p837) target = $region76
        $region75: #{tpu_custom_call.1} parent=71 // pred_region
          %v840 = vld [vmem:[%s489] sm:$0x1]
          %v841 = vld [vmem:[%s8] sm:$0xff]
          %v842 = vld [vmem:[%s8 + $0x8] sm:$0xff]
          %v843 = vld [vmem:[%s8 + $0x10] sm:$0xff]
          %v844 = vld [vmem:[%s8 + $0x18] sm:$0xff]
          %846 = vset.pattern.permute.xlu0 0
          %847 = vperm.xlu0 %846, %v841
          %v848 = vpop.permute.xlu0 %847
          %851 = vset.pattern.permute.xlu0 0
          %852 = vperm.xlu0 %851, %v842
          %v853 = vpop.permute.xlu0 %852
          %856 = vset.pattern.permute.xlu0 0
          %857 = vperm.xlu0 %856, %v843
          %v858 = vpop.permute.xlu0 %857
          %861 = vset.pattern.permute.xlu0 0
          %862 = vperm.xlu0 %861, %v844
          %v863 = vpop.permute.xlu0 %862
          %v866 = vlaneseq
          %v867 = vshrl.u32 %v866, 7
          %v868 = vsub.s32 0, %v867
          %v869 = vrot.slane %v840, %v868
          %v871 = vmul.f32 %v848, %v869
          %v872 = vmul.f32 %v853, %v869
          %v873 = vmul.f32 %v858, %v869
          %v874 = vmul.f32 %v863, %v869
          %v875 = vld [vmem:[%s9] sm:$0xff]
          %v876 = vld [vmem:[%s9 + $0x8] sm:$0xff]
          %v877 = vld [vmem:[%s9 + $0x10] sm:$0xff]
          %v878 = vld [vmem:[%s9 + $0x18] sm:$0xff]
          %880 = vset.pattern.permute.xlu0 0
          %881 = vperm.xlu0 %880, %v875
          %v882 = vpop.permute.xlu0 %881
          %885 = vset.pattern.permute.xlu0 0
          %886 = vperm.xlu0 %885, %v876
          %v887 = vpop.permute.xlu0 %886
          %890 = vset.pattern.permute.xlu0 0
          %891 = vperm.xlu0 %890, %v877
          %v892 = vpop.permute.xlu0 %891
          %895 = vset.pattern.permute.xlu0 0
          %896 = vperm.xlu0 %895, %v878
          %v897 = vpop.permute.xlu0 %896
          %v899 = vadd.f32 %v871, %v882
          %v900 = vadd.f32 %v872, %v887
          %v901 = vadd.f32 %v873, %v892
          %v902 = vadd.f32 %v874, %v897
          %v903 = vtanh.pop %v899
          %v904 = vtanh.pop %v900
          %v905 = vtanh.pop %v901
          %v906 = vtanh.pop %v902
          %v907 = vld [vmem:[%s10] sm:$0xf]
          %v908 = vld [vmem:[%s11] sm:$0xf]
          %910 = vset.pattern.permute.xlu0 0
          %911 = vperm.xlu0 %910, %v908
          %v912 = vpop.permute.xlu0 %911
          %v915 = vsel %vm654, %v907, 0
          %917 = vmatprep.subr.mxu0 0.0
          %918 = vmatpush1.msra.mxu0 %v903
          %919 = vmatprep.subr.mxu0 0.0
          %920 = vmatpush1.msra.mxu0 %v904
          %921 = vmatprep.subr.mxu0 0.0
          %922 = vmatpush1.msra.mxu0 %v905
          %923 = vmatprep.subr.mxu0 0.0
          %924 = vmatpush1.msra.mxu0 %v906
          %925 = vmatprep.subr.mxu0 0.0
          %926 = vmatpush1.msra.mxu0 0.0
          %927 = vmatprep.subr.mxu0 0.0
          %928 = vmatpush1.msra.mxu0 0.0
          %929 = vmatprep.subr.mxu0 0.0
          %930 = vmatpush1.msra.mxu0 0.0
          %931 = vmatprep.subr.mxu0 0.0
          %932 = vmatpush1.msra.mxu0 0.0
          %933 = vmatprep.subr.mxu0 0.0
          %934 = vmatpush1.msra.mxu0 0.0
          %935 = vmatprep.subr.mxu0 0.0
          %936 = vmatpush1.msra.mxu0 0.0
          %937 = vmatprep.subr.mxu0 0.0
          %938 = vmatpush1.msra.mxu0 0.0
          %939 = vmatprep.subr.mxu0 0.0
          %940 = vmatpush1.msra.mxu0 0.0
          %941 = vmatprep.subr.mxu0 0.0
          %942 = vmatpush1.msra.mxu0 0.0
          %943 = vmatprep.subr.mxu0 0.0
          %944 = vmatpush1.msra.mxu0 0.0
          %945 = vmatprep.subr.mxu0 0.0
          %946 = vmatpush1.msra.mxu0 0.0
          %947 = vmatprep.subr.mxu0 0.0
          %948 = vmatpush1.msra.mxu0 0.0
          %949 = vmatprep.subr.mxu0 0.0
          %950 = vmatpush1.msra.mxu0 0.0
          %951 = vmatprep.subr.mxu0 0.0
          %952 = vmatpush1.msra.mxu0 0.0
          %953 = vmatprep.subr.mxu0 0.0
          %954 = vmatpush1.msra.mxu0 0.0
          %955 = vmatprep.subr.mxu0 0.0
          %956 = vmatpush1.msra.mxu0 0.0
          %957 = vmatprep.subr.mxu0 0.0
          %958 = vmatpush1.msra.mxu0 0.0
          %959 = vmatprep.subr.mxu0 0.0
          %960 = vmatpush1.msra.mxu0 0.0
          %961 = vmatprep.subr.mxu0 0.0
          %962 = vmatpush1.msra.mxu0 0.0
          %963 = vmatprep.subr.mxu0 0.0
          %964 = vmatpush1.msra.mxu0 0.0
          %965 = vmatprep.subr.mxu0 0.0
          %966 = vmatpush1.msra.mxu0 0.0
          %967 = vmatprep.subr.mxu0 0.0
          %968 = vmatpush1.msra.mxu0 0.0
          %969 = vmatprep.subr.mxu0 0.0
          %970 = vmatpush1.msra.mxu0 0.0
          %971 = vmatprep.subr.mxu0 0.0
          %972 = vmatpush1.msra.mxu0 0.0
          %973 = vmatprep.subr.mxu0 0.0
          %974 = vmatpush1.msra.mxu0 0.0
          %975 = vmatprep.subr.mxu0 0.0
          %976 = vmatpush1.msra.mxu0 0.0
          %977 = vmatprep.subr.mxu0 0.0
          %978 = vmatpush1.msra.mxu0 0.0
          %979 = vmatprep.subr.mxu0 0.0
          %980 = vmatpush1.msra.mxu0 0.0
          %981 = vmatprep.mubr.f32.mxu0 0.0
          %982 = vmatmul.mubr.f32.gmra.mrb[0].mxu0 %v915
          %v983 = vpop.f32.mrb[0].mxu0
          %v984 = vadd.f32 %v912, %v983
          %v985 = vpop.f32.mrb[0].mxu0
          %986 = vdwg.mxu0
          %vm987 = vcmask 125952
          %988 = vst.msk [vmem:[#allocation2] sm:$0xf] %vm987, %v984
        $region76: #{tpu_custom_call.1} parent=71 // pred_fallthru
          _
        %v989 = vld [vmem:[#allocation2] sm:$0xf]
        %v990 = vmul.f32 %v833, %v989
        %vm991 = vcmask 125952
        %v992 = vsel %vm991, %v990, 0.0
        %v993 = vrot.slane %v992, 4
        %v994 = vadd.f32 %v992, %v993
        %v995 = vrot.slane %v994, 2
        %v996 = vadd.f32 %v994, %v995
        %v997 = vrot.slane %v996, 1
        %v998 = vadd.f32 %v996, %v997
        %s999 = sld [smem:[#allocation3]]
        %v1000 = vstv %s999
        %v1001 = vadd.f32 %v998, %v1000
        %vm1002 = vcmask 122880
        %1003 = vst.msk [vmem:[%s479] sm:$0x1] %vm1002, %v1001
        %s1004 = sand.u32 %s340, 1
        %s1005 = scalar_lea.sflag [#allocation5], %s1004
        %s1006 = sand.u32 %s340, 1
        %s1007 = scalar_lea.vmem [#allocation4], %s1006
        // Predicated region
        $region77: #{tpu_custom_call.1} parent=71 // pred_check
          %p1008 = pneg %p350
        $region78: #{tpu_custom_call.1} parent=71 // pred_check_branch
          %1010 = sbr.rel (%p1008) target = $region80
        $region79: #{tpu_custom_call.1} parent=71 // pred_region
          %s1012 = ssub.s32 16, 16
          %1013 = vsyncadd %s1005, %s1012
          %s1014 = sadd.s32 %s32, %s33
          %s1015 = smul.addr %s1014, 16
          %s1016 = scalar_lea.hbm %s13, %s1015
          %s1018 = sshll.u32 %s1007, 4
          %s1019 = int_to_ptr.vmem [resolvable:$true] %s1018
          %1021 = dma.vmem_to_hbm [thread:$0]  %s1019, 16, %s1016, %s1005
        $region80: #{tpu_custom_call.1} parent=71 // pred_fallthru
          _
      $region72: #{tpu_custom_call.1} parent=5 // pred_fallthru
        _
      %p1022 = scmp.le.s32.totalorder 2, %s23
      // Predicated region
      $region81: #{tpu_custom_call.1} parent=5 // pred_check
        %p1023 = pneg %p1022
      $region82: #{tpu_custom_call.1} parent=5 // pred_check_branch
        %1025 = sbr.rel (%p1023) target = $region84
      $region83: #{tpu_custom_call.1} parent=5 // pred_region
        %s1026 = ssub.s32 %s23, 2
        // Predicated region
        $region85: #{tpu_custom_call.1} parent=83 // pred_check
          %p1027 = pneg %p356
        $region86: #{tpu_custom_call.1} parent=83 // pred_check_branch
          %1029 = sbr.rel (%p1027) target = $region88
        $region87: #{tpu_custom_call.1} parent=83 // pred_region
          %s1030 = sand.u32 %s341, 1
          %s1031 = scalar_lea.sflag [#allocation5], %s1030
          %s1032 = sand.u32 %s341, 1
          %s1033 = scalar_lea.vmem [#allocation4], %s1032
          %1034 = dma.done %s1031, 16
        $region88: #{tpu_custom_call.1} parent=83 // pred_fallthru
          _
      $region84: #{tpu_custom_call.1} parent=5 // pred_fallthru
        _
    $region6: #{tpu_custom_call.1} parent=1 // loop_footer
      %s27 = sadd.s32 1, %s23
    $region7: #{tpu_custom_call.1} parent=1 // loop_footer_branch
      %22 = sbr.rel target = $region3
    $region8: #{tpu_custom_call.1} parent=1 // loop_exit
      _
    %1035 = vsyncpa [#allocation5], 1
    %s1036 = scalar_lea.sflag [#allocation5], 1
    %1037 = vsyncpa %s1036, 1

</llo_original>
